<compile_context>
chip_gen: v7x
topology: tpu7x:2x2x1
jax: 0.10.0
libtpu: 0.0.40
codegen_flags: <defaults>
</compile_context>

<pallas_src>
import functools

import jax
import jax.numpy as jnp
from jax import lax
from jax.experimental import pallas as pl
from jax.experimental.pallas import tpu as pltpu

# Model dims (from the PyTorch module).
LAYER_DIMS = [(10, 20), (20, 20), (20, 10), (10, 5)]   # (in, out) per Linear
IN_DIM = LAYER_DIMS[0][0]          # 10
OUT_DIM = LAYER_DIMS[-1][1]        # 5
NUM_LAYERS = len(LAYER_DIMS)       # 4
FPAD = 32                          # common padded feature dim for the weight slab
OUT_PAD = 8                        # sublane-aligned output rows (rows 5..7 are zero)


def toy_mlp_kernel(x_ref, w_ref, b_ref, o_ref):
    """x_ref: (tb, IN_DIM) f32, native row-major batch tile (partial tiles masked).
       w_ref: (4, FPAD, FPAD) weights, PyTorch (out, in) layout, zero-padded.
       b_ref: (4, FPAD, 1)   f32 biases (column vectors), zero-padded.
       o_ref: (OUT_PAD, tb)  f32; rows 0..4 hold the result, rows 5..7 are zero."""
    cdt = w_ref.dtype
    x = x_ref[...].astype(cdt)                                   # (tb, 10)

    # Layer 1: contract the feature axes of W (out, in) and x (batch, in).
    # Result is (FPAD, tb): the MXU puts the batch on the 128-lane axis, so no
    # wrapper-side transpose / feature-padding pass is needed.
    w0 = w_ref[0][:, :IN_DIM]                                    # (FPAD, 10)
    h = lax.dot_general(w0, x, (((1,), (1,)), ((), ())),
                        preferred_element_type=jnp.float32)
    h = jnp.maximum(h + b_ref[0], 0.0)

    # Layers 2..3: ReLU(W @ h + b) in (features, batch) orientation.  Zero-padded
    # weight rows/cols keep the padded feature rows exactly zero through every layer.
    for l in range(1, NUM_LAYERS - 1):
        h = jnp.dot(w_ref[l], h.astype(cdt), preferred_element_type=jnp.float32)
        h = jnp.maximum(h + b_ref[l], 0.0)

    # Layer 4 (no ReLU): compute only the OUT_PAD rows and store directly
    # (avoids a full (FPAD, tb) result plus an extra VMEM slice copy).
    w3 = w_ref[NUM_LAYERS - 1][:OUT_PAD, :]                      # (OUT_PAD, FPAD)
    o_ref[...] = (jnp.dot(w3, h.astype(cdt), preferred_element_type=jnp.float32)
                  + b_ref[NUM_LAYERS - 1][:OUT_PAD])


def _round_up(x, m):
    return ((x + m - 1) // m) * m


def _tile_plan(batch, target_tb):
    """Return (tb, n_tiles).  tb is lane-aligned (multiple of 128) except for tiny
    batches, which get one exact-fit block.  Prefers >= 2 (even) grid steps when the
    batch is large enough so v7x's two TensorCores both get work."""
    if _round_up(batch, 128) < 256:            # batch <= 128: single exact block
        return batch, 1
    n = max(2, -(-batch // target_tb))         # cdiv
    if n % 2:
        n += 1                                 # even step count for 2-TC sharding
    tb = _round_up(-(-batch // n), 128)
    return tb, -(-batch // tb)


@functools.partial(jax.jit, static_argnames=("target_tb", "col_major"))
def toy_model_forward(x, w_all, b_all, *, target_tb=1024, col_major=False):
    """x: (B, 10) f32.  w_all/b_all from pack_params.
       col_major=False -> (B, 5) f32 (PyTorch semantics).
       col_major=True  -> (8, B) f32 lane-dense kernel output (rows 5..7 zero) so a
                          downstream consumer can fuse the re-layout."""
    B = x.shape[0]
    tb, n_tiles = _tile_plan(B, target_tb)
    assert tb == B or tb % 128 == 0            # lane-dense output contract

    out_cm = pl.pallas_call(
        toy_mlp_kernel,
        out_shape=jax.ShapeDtypeStruct((OUT_PAD, B), jnp.float32),
        grid=(n_tiles,),
        in_specs=[
            pl.BlockSpec((tb, IN_DIM), lambda i: (i, 0)),             # native x tile
            # Constant index_maps: the weight/bias slabs are fetched once and reused
            # across grid steps (no per-step re-DMA).
            pl.BlockSpec((NUM_LAYERS, FPAD, FPAD), lambda i: (0, 0, 0)),
            pl.BlockSpec((NUM_LAYERS, FPAD, 1), lambda i: (0, 0, 0)),
        ],
        out_specs=pl.BlockSpec((OUT_PAD, tb), lambda i: (0, i)),
        compiler_params=pltpu.CompilerParams(
            dimension_semantics=("parallel",),
            vmem_limit_bytes=32 * 1024 * 1024,
        ),
    )(x, w_all, b_all)

    if col_major:
        return out_cm
    # PyTorch-equivalent layout.
    # TODO(synk): fuse this re-layout into the real consumer when one exists — it is a
    # second HBM pass comparable to the kernel's entire useful traffic.
    return out_cm[:OUT_DIM, :].T


def pack_params(params, w_dtype=jnp.bfloat16):
    """params: list of (W, b) in PyTorch layout, W (out, in), b (out,).
       Returns (w_all, b_all): (4, FPAD, FPAD) weights in w_dtype, (4, FPAD, 1) f32 biases."""
    w_all = jnp.zeros((NUM_LAYERS, FPAD, FPAD), w_dtype)
    b_all = jnp.zeros((NUM_LAYERS, FPAD, 1), jnp.float32)
    for l, (w, b) in enumerate(params):
        out_f, in_f = w.shape
        w_all = w_all.at[l, :out_f, :in_f].set(w.astype(w_dtype))
        b_all = b_all.at[l, :out_f, 0].set(b.astype(jnp.float32))
    return w_all, b_all


def init_params(key):
    """PyTorch nn.Linear default init: U[-1/sqrt(fan_in), +], native (out, in) layout."""
    params = []
    for (fan_in, fan_out) in LAYER_DIMS:
        key, kw, kb = jax.random.split(key, 3)
        bound = 1.0 / jnp.sqrt(float(fan_in))
        w = jax.random.uniform(kw, (fan_out, fan_in), jnp.float32, -bound, bound)
        b = jax.random.uniform(kb, (fan_out,), jnp.float32, -bound, bound)
        params.append((w, b))
    return params


def reference_forward(x, params):
    h = x
    for i, (w, b) in enumerate(params):
        h = h @ w.T + b                      # PyTorch nn.Linear semantics
        if i < len(params) - 1:
            h = jnp.maximum(h, 0.0)
    return h


if __name__ == "__main__":
    key = jax.random.PRNGKey(0)
    key, kx = jax.random.split(key)
    params = init_params(key)

    # 1) Exact-math check: f32 weights, tiny batch -> one exact-fit block (grid=1).
    w32, b32 = pack_params(params, w_dtype=jnp.float32)
    x = jax.random.normal(kx, (8, IN_DIM), jnp.float32)
    out = jax.block_until_ready(toy_model_forward(x, w32, b32))
    ref = reference_forward(x, params)
    assert out.shape == (8, OUT_DIM), out.shape
    assert jnp.allclose(out, ref, atol=1e-5, rtol=1e-5), "f32 mismatch (B=8)"

    # 2) Fast path: bf16 weights, B=300 -> 2 grid steps of tb=256 with a masked
    #    partial last block (no wrapper padding pass).  bf16 -> looser tolerance.
    wbf, bbf = pack_params(params, w_dtype=jnp.bfloat16)
    key, kx2 = jax.random.split(key)
    x2 = jax.random.normal(kx2, (300, IN_DIM), jnp.float32)
    out2 = jax.block_until_ready(toy_model_forward(x2, wbf, bbf))
    ref2 = reference_forward(x2, params)
    assert out2.shape == (300, OUT_DIM), out2.shape
    assert jnp.allclose(out2, ref2, atol=5e-2, rtol=5e-2), "bf16 mismatch (B=300)"

    # 3) Column-major consumer-fused output path (f32 weights, 3 grid steps of 128).
    out3 = jax.block_until_ready(
        toy_model_forward(x2, w32, b32, target_tb=128, col_major=True))
    assert out3.shape == (OUT_PAD, 300), out3.shape
    assert jnp.allclose(out3[:OUT_DIM].T, ref2, atol=1e-5, rtol=1e-5), \
        "col-major mismatch (B=300)"

    print("KERNEL_OK")
</pallas_src>

<mosaic_0001>
module attributes {stable_mosaic.version = 11 : i64} {
  func.func @toy_mlp_kernel(%arg0: i32, %arg1: memref<8x10xf32, #tpu.memory_space<vmem>>, %arg2: memref<4x32x32xf32, #tpu.memory_space<vmem>>, %arg3: memref<4x32x1xf32, #tpu.memory_space<vmem>>, %arg4: memref<8x8xf32, #tpu.memory_space<vmem>>) attributes {dimension_semantics = [#tpu.dimension_semantics<parallel>], iteration_bounds = array<i64: 1>, scalar_prefetch = 0 : i64, scratch_operands = 0 : i64, tpu.core_type = #tpu.core_type<tc>, window_params = [{transform_indices = @transform_0, window_bounds = array<i64: 8, 10>}, {pipeline_mode = #tpu.pipeline_mode<synchronous>, transform_indices = @transform_1, window_bounds = array<i64: 4, 32, 32>}, {pipeline_mode = #tpu.pipeline_mode<synchronous>, transform_indices = @transform_2, window_bounds = array<i64: 4, 32, 1>}, {transform_indices = @transform_3, window_bounds = array<i64: 8, 8>}]} {
    %c0 = arith.constant 0 : index
    %c0_0 = arith.constant 0 : index
    %0 = vector.load %arg1[%c0, %c0_0] : memref<8x10xf32, #tpu.memory_space<vmem>>, vector<8x10xf32>
    %c0_1 = arith.constant 0 : index
    %c0_2 = arith.constant 0 : index
    %c0_3 = arith.constant 0 : index
    %1 = vector.load %arg2[%c0_1, %c0_2, %c0_3] : memref<4x32x32xf32, #tpu.memory_space<vmem>>, vector<1x32x32xf32>
    %2 = vector.shape_cast %1 : vector<1x32x32xf32> to vector<32x32xf32>
    %3 = vector.extract_strided_slice %2 {offsets = [0, 0], sizes = [32, 10], strides = [1, 1]} : vector<32x32xf32> to vector<32x10xf32>
    %cst = arith.constant dense<0.000000e+00> : vector<32x8xf32>
    %4 = tpu.matmul %3, %0, %cst {dimension_numbers = #tpu.dot_dimension_numbers<[1], [1], [0], [0], [0, 0, 1, 0], [], []>} : vector<32x10xf32>, vector<8x10xf32>, vector<32x8xf32> -> vector<32x8xf32>
    %c0_4 = arith.constant 0 : index
    %c0_5 = arith.constant 0 : index
    %c0_6 = arith.constant 0 : index
    %5 = vector.load %arg3[%c0_4, %c0_5, %c0_6] : memref<4x32x1xf32, #tpu.memory_space<vmem>>, vector<1x32x1xf32>
    %6 = vector.shape_cast %5 : vector<1x32x1xf32> to vector<32x1xf32>
    %7 = vector.broadcast %6 : vector<32x1xf32> to vector<32x8xf32>
    %8 = arith.addf %4, %7 : vector<32x8xf32>
    %cst_7 = arith.constant 0.000000e+00 : f32
    %9 = vector.broadcast %cst_7 : f32 to vector<32x8xf32>
    %10 = arith.maximumf %8, %9 : vector<32x8xf32>
    %c1 = arith.constant 1 : index
    %c0_8 = arith.constant 0 : index
    %c0_9 = arith.constant 0 : index
    %11 = vector.load %arg2[%c1, %c0_8, %c0_9] : memref<4x32x32xf32, #tpu.memory_space<vmem>>, vector<1x32x32xf32>
    %12 = vector.shape_cast %11 : vector<1x32x32xf32> to vector<32x32xf32>
    %cst_10 = arith.constant dense<0.000000e+00> : vector<32x8xf32>
    %13 = tpu.matmul %12, %10, %cst_10 {dimension_numbers = #tpu.dot_dimension_numbers<[1], [0], [0], [1], [0, 0, 1, 1], [], []>} : vector<32x32xf32>, vector<32x8xf32>, vector<32x8xf32> -> vector<32x8xf32>
    %c1_11 = arith.constant 1 : index
    %c0_12 = arith.constant 0 : index
    %c0_13 = arith.constant 0 : index
    %14 = vector.load %arg3[%c1_11, %c0_12, %c0_13] : memref<4x32x1xf32, #tpu.memory_space<vmem>>, vector<1x32x1xf32>
    %15 = vector.shape_cast %14 : vector<1x32x1xf32> to vector<32x1xf32>
    %16 = vector.broadcast %15 : vector<32x1xf32> to vector<32x8xf32>
    %17 = arith.addf %13, %16 : vector<32x8xf32>
    %cst_14 = arith.constant 0.000000e+00 : f32
    %18 = vector.broadcast %cst_14 : f32 to vector<32x8xf32>
    %19 = arith.maximumf %17, %18 : vector<32x8xf32>
    %c2 = arith.constant 2 : index
    %c0_15 = arith.constant 0 : index
    %c0_16 = arith.constant 0 : index
    %20 = vector.load %arg2[%c2, %c0_15, %c0_16] : memref<4x32x32xf32, #tpu.memory_space<vmem>>, vector<1x32x32xf32>
    %21 = vector.shape_cast %20 : vector<1x32x32xf32> to vector<32x32xf32>
    %cst_17 = arith.constant dense<0.000000e+00> : vector<32x8xf32>
    %22 = tpu.matmul %21, %19, %cst_17 {dimension_numbers = #tpu.dot_dimension_numbers<[1], [0], [0], [1], [0, 0, 1, 1], [], []>} : vector<32x32xf32>, vector<32x8xf32>, vector<32x8xf32> -> vector<32x8xf32>
    %c2_18 = arith.constant 2 : index
    %c0_19 = arith.constant 0 : index
    %c0_20 = arith.constant 0 : index
    %23 = vector.load %arg3[%c2_18, %c0_19, %c0_20] : memref<4x32x1xf32, #tpu.memory_space<vmem>>, vector<1x32x1xf32>
    %24 = vector.shape_cast %23 : vector<1x32x1xf32> to vector<32x1xf32>
    %25 = vector.broadcast %24 : vector<32x1xf32> to vector<32x8xf32>
    %26 = arith.addf %22, %25 : vector<32x8xf32>
    %cst_21 = arith.constant 0.000000e+00 : f32
    %27 = vector.broadcast %cst_21 : f32 to vector<32x8xf32>
    %28 = arith.maximumf %26, %27 : vector<32x8xf32>
    %c3 = arith.constant 3 : index
    %c0_22 = arith.constant 0 : index
    %c0_23 = arith.constant 0 : index
    %29 = vector.load %arg2[%c3, %c0_22, %c0_23] : memref<4x32x32xf32, #tpu.memory_space<vmem>>, vector<1x32x32xf32>
    %30 = vector.shape_cast %29 : vector<1x32x32xf32> to vector<32x32xf32>
    %31 = vector.extract_strided_slice %30 {offsets = [0, 0], sizes = [8, 32], strides = [1, 1]} : vector<32x32xf32> to vector<8x32xf32>
    %cst_24 = arith.constant dense<0.000000e+00> : vector<8x8xf32>
    %32 = tpu.matmul %31, %28, %cst_24 {dimension_numbers = #tpu.dot_dimension_numbers<[1], [0], [0], [1], [0, 0, 1, 1], [], []>} : vector<8x32xf32>, vector<32x8xf32>, vector<8x8xf32> -> vector<8x8xf32>
    %c3_25 = arith.constant 3 : index
    %c0_26 = arith.constant 0 : index
    %c0_27 = arith.constant 0 : index
    %33 = vector.load %arg3[%c3_25, %c0_26, %c0_27] : memref<4x32x1xf32, #tpu.memory_space<vmem>>, vector<1x32x1xf32>
    %34 = vector.shape_cast %33 : vector<1x32x1xf32> to vector<32x1xf32>
    %35 = vector.extract_strided_slice %34 {offsets = [0, 0], sizes = [8, 1], strides = [1, 1]} : vector<32x1xf32> to vector<8x1xf32>
    %36 = vector.broadcast %35 : vector<8x1xf32> to vector<8x8xf32>
    %37 = arith.addf %32, %36 : vector<8x8xf32>
    %c0_28 = arith.constant 0 : index
    %c0_29 = arith.constant 0 : index
    %38 = vector.load %arg4[%c0_28, %c0_29] : memref<8x8xf32, #tpu.memory_space<vmem>>, vector<8x8xf32>
    tpu.vector_store %arg4[%c0_28, %c0_29], %37 {strides = array<i32>} : memref<8x8xf32, #tpu.memory_space<vmem>>, vector<8x8xf32>,
    return
  }
  func.func @transform_0(%arg0: i32) -> (i32, i32) {
    %c0_i32 = arith.constant 0 : i32
    %c0_i32_0 = arith.constant 0 : i32
    return %arg0, %c0_i32 : i32, i32
  }
  func.func @transform_1(%arg0: i32) -> (i32, i32, i32) {
    %c0_i32 = arith.constant 0 : i32
    %c0_i32_0 = arith.constant 0 : i32
    %c0_i32_1 = arith.constant 0 : i32
    %c0_i32_2 = arith.constant 0 : i32
    return %c0_i32, %c0_i32_0, %c0_i32_1 : i32, i32, i32
  }
  func.func @transform_2(%arg0: i32) -> (i32, i32, i32) {
    %c0_i32 = arith.constant 0 : i32
    %c0_i32_0 = arith.constant 0 : i32
    %c0_i32_1 = arith.constant 0 : i32
    %c0_i32_2 = arith.constant 0 : i32
    return %c0_i32, %c0_i32_0, %c0_i32_1 : i32, i32, i32
  }
  func.func @transform_3(%arg0: i32) -> (i32, i32) {
    %c0_i32 = arith.constant 0 : i32
    %c0_i32_0 = arith.constant 0 : i32
    return %c0_i32, %arg0 : i32, i32
  }
}

</mosaic_0001>

<llo_original>
// kernel: toy_model_forward.1
$region0: #{toy_model_forward.1}
  #allocation0 [shape = 'u32[]', space=smem, size = 0x4, offset = 0x4, fixed_abs, tag = 'smem constant byte address 0x4 - core index']
  #allocation1 [shape = 'u32[144,128]{1,0:T(1,128)}', space=vmem, size = 0x12000, scoped, tag = 'internal scratch']
  %s0 = inlined_call_operand.hbm [shape: f32[8,10], index: 0, kind: input, shape index: {}]
  %s1 = inlined_call_operand.vmem [shape: f32[4,32,32], index: 1, kind: input, shape index: {}]
  %s2 = inlined_call_operand.vmem [shape: f32[4,32,1], index: 2, kind: input, shape index: {}]
  %s3 = inlined_call_operand.vmem [shape: f32[8,8], index: 3, kind: output, shape index: {}]
  %s4 = sld [smem:[#allocation0]]
  $region26: #{toy_model_forward.1} parent=0
    _
  %s6 = ssub.s32 1, %s4
  %s7 = scalar_select 0, %s6, %s4
  $region1: #{toy_model_forward.1} parent=0
    #allocation2 [shape = 'u8[4096]{0}', space=vmem, size = 0x1000, scoped, tag = 'input window, operand 0, single buffered']
    #allocation3 [shape = 's32[1]{0}', space=sflag, size = 0x4, scoped, tag = 'scoped memory for toy_model_forward.1']
    %8 = vsyncpa [#allocation3], 0
    // Predicated region
    $region2: #{toy_model_forward.1} parent=1 // pred_check
      _
    $region3: #{toy_model_forward.1} parent=1 // pred_check_branch
      %10 = sbr.rel (0) target = $region5
    $region4: #{toy_model_forward.1} parent=1 // pred_region
      %s12 = ssub.s32 128, 128
      %13 = vsyncadd [#allocation3], %s12
      %s15 = sshll.u32 [#allocation2], 4
      %s16 = int_to_ptr.vmem [resolvable:$true] %s15
      %18 = dma.hbm_to_vmem [thread:$0]  %s0, 128, %s16, [#allocation3]
    $region5: #{toy_model_forward.1} parent=1 // pred_fallthru
      _
    // Predicated region
    $region6: #{toy_model_forward.1} parent=1 // pred_check
      _
    $region7: #{toy_model_forward.1} parent=1 // pred_check_branch
      %20 = sbr.rel (0) target = $region9
    $region8: #{toy_model_forward.1} parent=1 // pred_region
      _
    $region9: #{toy_model_forward.1} parent=1 // pred_fallthru
      _
    // Predicated region
    $region10: #{toy_model_forward.1} parent=1 // pred_check
      _
    $region11: #{toy_model_forward.1} parent=1 // pred_check_branch
      %22 = sbr.rel (0) target = $region13
    $region12: #{toy_model_forward.1} parent=1 // pred_region
      _
    $region13: #{toy_model_forward.1} parent=1 // pred_fallthru
      _
    // Predicated region
    $region14: #{toy_model_forward.1} parent=1 // pred_check
      _
    $region15: #{toy_model_forward.1} parent=1 // pred_check_branch
      %24 = sbr.rel (0) target = $region17
    $region16: #{toy_model_forward.1} parent=1 // pred_region
      %25 = dma.done [#allocation3], 128
    $region17: #{toy_model_forward.1} parent=1 // pred_fallthru
      _
    %v26 = vld [vmem:[#allocation2] sm:$0xff]
    %v27 = vld [vmem:[%s1] sm:$0xff]
    %v28 = vld [vmem:[%s1 + $0x8] sm:$0xff]
    %v29 = vld [vmem:[%s1 + $0x10] sm:$0xff]
    %v30 = vld [vmem:[%s1 + $0x18] sm:$0xff]
    %v31 = vld [vmem:[%s2] sm:$0xff]
    %v32 = vld [vmem:[%s2 + $0x8] sm:$0xff]
    %v33 = vld [vmem:[%s2 + $0x10] sm:$0xff]
    %v34 = vld [vmem:[%s2 + $0x18] sm:$0xff]
    %36 = vset.pattern.permute.xlu0 0
    %37 = vperm.xlu0 %36, %v31
    %v38 = vpop.permute.xlu0 %37
    %41 = vset.pattern.permute.xlu0 0
    %42 = vperm.xlu0 %41, %v32
    %v43 = vpop.permute.xlu0 %42
    %46 = vset.pattern.permute.xlu0 0
    %47 = vperm.xlu0 %46, %v33
    %v48 = vpop.permute.xlu0 %47
    %51 = vset.pattern.permute.xlu0 0
    %52 = vperm.xlu0 %51, %v34
    %v53 = vpop.permute.xlu0 %52
    %vm55 = vcmask 80896
    %v57 = vsel %vm55, %v27, 0
    %v60 = vsel %vm55, %v28, 0
    %v63 = vsel %vm55, %v29, 0
    %v66 = vsel %vm55, %v30, 0
    %v69 = vsel %vm55, %v26, 0
    %71 = vmatprep.subr.mxu0 0.0
    %72 = vmatpush1.xpose.msra.mxu0 %v69
    %73 = vmatprep.subr.mxu0 0.0
    %74 = vmatpush1.xpose.msra.mxu0 0.0
    %75 = vmatprep.subr.mxu0 0.0
    %76 = vmatpush1.xpose.msra.mxu0 0.0
    %77 = vmatprep.subr.mxu0 0.0
    %78 = vmatpush1.xpose.msra.mxu0 0.0
    %79 = vmatprep.subr.mxu0 0.0
    %80 = vmatpush1.xpose.msra.mxu0 0.0
    %81 = vmatprep.subr.mxu0 0.0
    %82 = vmatpush1.xpose.msra.mxu0 0.0
    %83 = vmatprep.subr.mxu0 0.0
    %84 = vmatpush1.xpose.msra.mxu0 0.0
    %85 = vmatprep.subr.mxu0 0.0
    %86 = vmatpush1.xpose.msra.mxu0 0.0
    %87 = vmatprep.subr.mxu0 0.0
    %88 = vmatpush1.xpose.msra.mxu0 0.0
    %89 = vmatprep.subr.mxu0 0.0
    %90 = vmatpush1.xpose.msra.mxu0 0.0
    %91 = vmatprep.subr.mxu0 0.0
    %92 = vmatpush1.xpose.msra.mxu0 0.0
    %93 = vmatprep.subr.mxu0 0.0
    %94 = vmatpush1.xpose.msra.mxu0 0.0
    %95 = vmatprep.subr.mxu0 0.0
    %96 = vmatpush1.xpose.msra.mxu0 0.0
    %97 = vmatprep.subr.mxu0 0.0
    %98 = vmatpush1.xpose.msra.mxu0 0.0
    %99 = vmatprep.subr.mxu0 0.0
    %100 = vmatpush1.xpose.msra.mxu0 0.0
    %101 = vmatprep.subr.mxu0 0.0
    %102 = vmatpush1.xpose.msra.mxu0 0.0
    %103 = vmatprep.subr.mxu0 0.0
    %104 = vmatpush1.xpose.msra.mxu0 0.0
    %105 = vmatprep.subr.mxu0 0.0
    %106 = vmatpush1.xpose.msra.mxu0 0.0
    %107 = vmatprep.subr.mxu0 0.0
    %108 = vmatpush1.xpose.msra.mxu0 0.0
    %109 = vmatprep.subr.mxu0 0.0
    %110 = vmatpush1.xpose.msra.mxu0 0.0
    %111 = vmatprep.subr.mxu0 0.0
    %112 = vmatpush1.xpose.msra.mxu0 0.0
    %113 = vmatprep.subr.mxu0 0.0
    %114 = vmatpush1.xpose.msra.mxu0 0.0
    %115 = vmatprep.subr.mxu0 0.0
    %116 = vmatpush1.xpose.msra.mxu0 0.0
    %117 = vmatprep.subr.mxu0 0.0
    %118 = vmatpush1.xpose.msra.mxu0 0.0
    %119 = vmatprep.subr.mxu0 0.0
    %120 = vmatpush1.xpose.msra.mxu0 0.0
    %121 = vmatprep.subr.mxu0 0.0
    %122 = vmatpush1.xpose.msra.mxu0 0.0
    %123 = vmatprep.subr.mxu0 0.0
    %124 = vmatpush1.xpose.msra.mxu0 0.0
    %125 = vmatprep.subr.mxu0 0.0
    %126 = vmatpush1.xpose.msra.mxu0 0.0
    %127 = vmatprep.subr.mxu0 0.0
    %128 = vmatpush1.xpose.msra.mxu0 0.0
    %129 = vmatprep.subr.mxu0 0.0
    %130 = vmatpush1.xpose.msra.mxu0 0.0
    %131 = vmatprep.subr.mxu0 0.0
    %132 = vmatpush1.xpose.msra.mxu0 0.0
    %133 = vmatprep.subr.mxu0 0.0
    %134 = vmatpush1.xpose.msra.mxu0 0.0
    %135 = vmatprep.mubr.f32.mxu0 0.0
    %136 = vmatmul.mubr.f32.gmra.mrb[0].mxu0 %v57
    %v137 = vpop.f32.mrb[0].mxu0
    %v138 = vadd.f32 %v38, %v137
    %v139 = vpop.f32.mrb[0].mxu0
    %140 = vmatprep.mubr.f32.mxu0 0.0
    %141 = vmatmul.mubr.f32.gmra.mrb[0].mxu0 %v60
    %v142 = vpop.f32.mrb[0].mxu0
    %v143 = vadd.f32 %v43, %v142
    %v144 = vpop.f32.mrb[0].mxu0
    %145 = vmatprep.mubr.f32.mxu0 0.0
    %146 = vmatmul.mubr.f32.gmra.mrb[0].mxu0 %v63
    %v147 = vpop.f32.mrb[0].mxu0
    %v148 = vadd.f32 %v48, %v147
    %v149 = vpop.f32.mrb[0].mxu0
    %150 = vmatprep.mubr.f32.mxu0 0.0
    %151 = vmatmul.mubr.f32.gmra.mrb[0].mxu0 %v66
    %v152 = vpop.f32.mrb[0].mxu0
    %v153 = vadd.f32 %v53, %v152
    %v154 = vpop.f32.mrb[0].mxu0
    %155 = vdwg.mxu0
    %v156 = vmax.f32 %v138, 0.0
    %v157 = vmax.f32 %v143, 0.0
    %v158 = vmax.f32 %v148, 0.0
    %v159 = vmax.f32 %v153, 0.0
    %s160 = scalar_lea.vmem %s1, 32
    %v161 = vld [vmem:[%s160] sm:$0xff]
    %v162 = vld [vmem:[%s160 + $0x8] sm:$0xff]
    %v163 = vld [vmem:[%s160 + $0x10] sm:$0xff]
    %v164 = vld [vmem:[%s160 + $0x18] sm:$0xff]
    %s165 = scalar_lea.vmem %s2, 32
    %v166 = vld [vmem:[%s165] sm:$0xff]
    %v167 = vld [vmem:[%s165 + $0x8] sm:$0xff]
    %v168 = vld [vmem:[%s165 + $0x10] sm:$0xff]
    %v169 = vld [vmem:[%s165 + $0x18] sm:$0xff]
    %171 = vset.pattern.permute.xlu0 0
    %172 = vperm.xlu0 %171, %v166
    %v173 = vpop.permute.xlu0 %172
    %176 = vset.pattern.permute.xlu0 0
    %177 = vperm.xlu0 %176, %v167
    %v178 = vpop.permute.xlu0 %177
    %181 = vset.pattern.permute.xlu0 0
    %182 = vperm.xlu0 %181, %v168
    %v183 = vpop.permute.xlu0 %182
    %186 = vset.pattern.permute.xlu0 0
    %187 = vperm.xlu0 %186, %v169
    %v188 = vpop.permute.xlu0 %187
    %vm190 = vcmask 261120
    %v192 = vsel %vm190, %v161, 0
    %v195 = vsel %vm190, %v162, 0
    %v198 = vsel %vm190, %v163, 0
    %v201 = vsel %vm190, %v164, 0
    %203 = vmatprep.subr.mxu0 0.0
    %204 = vmatpush1.msra.mxu0 %v156
    %205 = vmatprep.subr.mxu0 0.0
    %206 = vmatpush1.msra.mxu0 %v157
    %207 = vmatprep.subr.mxu0 0.0
    %208 = vmatpush1.msra.mxu0 %v158
    %209 = vmatprep.subr.mxu0 0.0
    %210 = vmatpush1.msra.mxu0 %v159
    %211 = vmatprep.subr.mxu0 0.0
    %212 = vmatpush1.msra.mxu0 0.0
    %213 = vmatprep.subr.mxu0 0.0
    %214 = vmatpush1.msra.mxu0 0.0
    %215 = vmatprep.subr.mxu0 0.0
    %216 = vmatpush1.msra.mxu0 0.0
    %217 = vmatprep.subr.mxu0 0.0
    %218 = vmatpush1.msra.mxu0 0.0
    %219 = vmatprep.subr.mxu0 0.0
    %220 = vmatpush1.msra.mxu0 0.0
    %221 = vmatprep.subr.mxu0 0.0
    %222 = vmatpush1.msra.mxu0 0.0
    %223 = vmatprep.subr.mxu0 0.0
    %224 = vmatpush1.msra.mxu0 0.0
    %225 = vmatprep.subr.mxu0 0.0
    %226 = vmatpush1.msra.mxu0 0.0
    %227 = vmatprep.subr.mxu0 0.0
    %228 = vmatpush1.msra.mxu0 0.0
    %229 = vmatprep.subr.mxu0 0.0
    %230 = vmatpush1.msra.mxu0 0.0
    %231 = vmatprep.subr.mxu0 0.0
    %232 = vmatpush1.msra.mxu0 0.0
    %233 = vmatprep.subr.mxu0 0.0
    %234 = vmatpush1.msra.mxu0 0.0
    %235 = vmatprep.subr.mxu0 0.0
    %236 = vmatpush1.msra.mxu0 0.0
    %237 = vmatprep.subr.mxu0 0.0
    %238 = vmatpush1.msra.mxu0 0.0
    %239 = vmatprep.subr.mxu0 0.0
    %240 = vmatpush1.msra.mxu0 0.0
    %241 = vmatprep.subr.mxu0 0.0
    %242 = vmatpush1.msra.mxu0 0.0
    %243 = vmatprep.subr.mxu0 0.0
    %244 = vmatpush1.msra.mxu0 0.0
    %245 = vmatprep.subr.mxu0 0.0
    %246 = vmatpush1.msra.mxu0 0.0
    %247 = vmatprep.subr.mxu0 0.0
    %248 = vmatpush1.msra.mxu0 0.0
    %249 = vmatprep.subr.mxu0 0.0
    %250 = vmatpush1.msra.mxu0 0.0
    %251 = vmatprep.subr.mxu0 0.0
    %252 = vmatpush1.msra.mxu0 0.0
    %253 = vmatprep.subr.mxu0 0.0
    %254 = vmatpush1.msra.mxu0 0.0
    %255 = vmatprep.subr.mxu0 0.0
    %256 = vmatpush1.msra.mxu0 0.0
    %257 = vmatprep.subr.mxu0 0.0
    %258 = vmatpush1.msra.mxu0 0.0
    %259 = vmatprep.subr.mxu0 0.0
    %260 = vmatpush1.msra.mxu0 0.0
    %261 = vmatprep.subr.mxu0 0.0
    %262 = vmatpush1.msra.mxu0 0.0
    %263 = vmatprep.subr.mxu0 0.0
    %264 = vmatpush1.msra.mxu0 0.0
    %265 = vmatprep.subr.mxu0 0.0
    %266 = vmatpush1.msra.mxu0 0.0
    %267 = vmatprep.mubr.f32.mxu0 0.0
    %268 = vmatmul.mubr.f32.gmra.mrb[0].mxu0 %v192
    %v269 = vpop.f32.mrb[0].mxu0
    %v270 = vadd.f32 %v173, %v269
    %v271 = vpop.f32.mrb[0].mxu0
    %272 = vmatprep.mubr.f32.mxu0 0.0
    %273 = vmatmul.mubr.f32.gmra.mrb[0].mxu0 %v195
    %v274 = vpop.f32.mrb[0].mxu0
    %v275 = vadd.f32 %v178, %v274
    %v276 = vpop.f32.mrb[0].mxu0
    %277 = vmatprep.mubr.f32.mxu0 0.0
    %278 = vmatmul.mubr.f32.gmra.mrb[0].mxu0 %v198
    %v279 = vpop.f32.mrb[0].mxu0
    %v280 = vadd.f32 %v183, %v279
    %v281 = vpop.f32.mrb[0].mxu0
    %282 = vmatprep.mubr.f32.mxu0 0.0
    %283 = vmatmul.mubr.f32.gmra.mrb[0].mxu0 %v201
    %v284 = vpop.f32.mrb[0].mxu0
    %v285 = vadd.f32 %v188, %v284
    %v286 = vpop.f32.mrb[0].mxu0
    %287 = vdwg.mxu0
    %v288 = vmax.f32 %v270, 0.0
    %v289 = vmax.f32 %v275, 0.0
    %v290 = vmax.f32 %v280, 0.0
    %v291 = vmax.f32 %v285, 0.0
    %s292 = scalar_lea.vmem %s1, 64
    %v293 = vld [vmem:[%s292] sm:$0xff]
    %v294 = vld [vmem:[%s292 + $0x8] sm:$0xff]
    %v295 = vld [vmem:[%s292 + $0x10] sm:$0xff]
    %v296 = vld [vmem:[%s292 + $0x18] sm:$0xff]
    %s297 = scalar_lea.vmem %s2, 64
    %v298 = vld [vmem:[%s297] sm:$0xff]
    %v299 = vld [vmem:[%s297 + $0x8] sm:$0xff]
    %v300 = vld [vmem:[%s297 + $0x10] sm:$0xff]
    %v301 = vld [vmem:[%s297 + $0x18] sm:$0xff]
    %303 = vset.pattern.permute.xlu0 0
    %304 = vperm.xlu0 %303, %v298
    %v305 = vpop.permute.xlu0 %304
    %308 = vset.pattern.permute.xlu0 0
    %309 = vperm.xlu0 %308, %v299
    %v310 = vpop.permute.xlu0 %309
    %313 = vset.pattern.permute.xlu0 0
    %314 = vperm.xlu0 %313, %v300
    %v315 = vpop.permute.xlu0 %314
    %318 = vset.pattern.permute.xlu0 0
    %319 = vperm.xlu0 %318, %v301
    %v320 = vpop.permute.xlu0 %319
    %v323 = vsel %vm190, %v293, 0
    %v326 = vsel %vm190, %v294, 0
    %v329 = vsel %vm190, %v295, 0
    %v332 = vsel %vm190, %v296, 0
    %334 = vmatprep.subr.mxu0 0.0
    %335 = vmatpush1.msra.mxu0 %v288
    %336 = vmatprep.subr.mxu0 0.0
    %337 = vmatpush1.msra.mxu0 %v289
    %338 = vmatprep.subr.mxu0 0.0
    %339 = vmatpush1.msra.mxu0 %v290
    %340 = vmatprep.subr.mxu0 0.0
    %341 = vmatpush1.msra.mxu0 %v291
    %342 = vmatprep.subr.mxu0 0.0
    %343 = vmatpush1.msra.mxu0 0.0
    %344 = vmatprep.subr.mxu0 0.0
    %345 = vmatpush1.msra.mxu0 0.0
    %346 = vmatprep.subr.mxu0 0.0
    %347 = vmatpush1.msra.mxu0 0.0
    %348 = vmatprep.subr.mxu0 0.0
    %349 = vmatpush1.msra.mxu0 0.0
    %350 = vmatprep.subr.mxu0 0.0
    %351 = vmatpush1.msra.mxu0 0.0
    %352 = vmatprep.subr.mxu0 0.0
    %353 = vmatpush1.msra.mxu0 0.0
    %354 = vmatprep.subr.mxu0 0.0
    %355 = vmatpush1.msra.mxu0 0.0
    %356 = vmatprep.subr.mxu0 0.0
    %357 = vmatpush1.msra.mxu0 0.0
    %358 = vmatprep.subr.mxu0 0.0
    %359 = vmatpush1.msra.mxu0 0.0
    %360 = vmatprep.subr.mxu0 0.0
    %361 = vmatpush1.msra.mxu0 0.0
    %362 = vmatprep.subr.mxu0 0.0
    %363 = vmatpush1.msra.mxu0 0.0
    %364 = vmatprep.subr.mxu0 0.0
    %365 = vmatpush1.msra.mxu0 0.0
    %366 = vmatprep.subr.mxu0 0.0
    %367 = vmatpush1.msra.mxu0 0.0
    %368 = vmatprep.subr.mxu0 0.0
    %369 = vmatpush1.msra.mxu0 0.0
    %370 = vmatprep.subr.mxu0 0.0
    %371 = vmatpush1.msra.mxu0 0.0
    %372 = vmatprep.subr.mxu0 0.0
    %373 = vmatpush1.msra.mxu0 0.0
    %374 = vmatprep.subr.mxu0 0.0
    %375 = vmatpush1.msra.mxu0 0.0
    %376 = vmatprep.subr.mxu0 0.0
    %377 = vmatpush1.msra.mxu0 0.0
    %378 = vmatprep.subr.mxu0 0.0
    %379 = vmatpush1.msra.mxu0 0.0
    %380 = vmatprep.subr.mxu0 0.0
    %381 = vmatpush1.msra.mxu0 0.0
    %382 = vmatprep.subr.mxu0 0.0
    %383 = vmatpush1.msra.mxu0 0.0
    %384 = vmatprep.subr.mxu0 0.0
    %385 = vmatpush1.msra.mxu0 0.0
    %386 = vmatprep.subr.mxu0 0.0
    %387 = vmatpush1.msra.mxu0 0.0
    %388 = vmatprep.subr.mxu0 0.0
    %389 = vmatpush1.msra.mxu0 0.0
    %390 = vmatprep.subr.mxu0 0.0
    %391 = vmatpush1.msra.mxu0 0.0
    %392 = vmatprep.subr.mxu0 0.0
    %393 = vmatpush1.msra.mxu0 0.0
    %394 = vmatprep.subr.mxu0 0.0
    %395 = vmatpush1.msra.mxu0 0.0
    %396 = vmatprep.subr.mxu0 0.0
    %397 = vmatpush1.msra.mxu0 0.0
    %398 = vmatprep.mubr.f32.mxu0 0.0
    %399 = vmatmul.mubr.f32.gmra.mrb[0].mxu0 %v323
    %v400 = vpop.f32.mrb[0].mxu0
    %v401 = vadd.f32 %v305, %v400
    %v402 = vpop.f32.mrb[0].mxu0
    %403 = vmatprep.mubr.f32.mxu0 0.0
    %404 = vmatmul.mubr.f32.gmra.mrb[0].mxu0 %v326
    %v405 = vpop.f32.mrb[0].mxu0
    %v406 = vadd.f32 %v310, %v405
    %v407 = vpop.f32.mrb[0].mxu0
    %408 = vmatprep.mubr.f32.mxu0 0.0
    %409 = vmatmul.mubr.f32.gmra.mrb[0].mxu0 %v329
    %v410 = vpop.f32.mrb[0].mxu0
    %v411 = vadd.f32 %v315, %v410
    %v412 = vpop.f32.mrb[0].mxu0
    %413 = vmatprep.mubr.f32.mxu0 0.0
    %414 = vmatmul.mubr.f32.gmra.mrb[0].mxu0 %v332
    %v415 = vpop.f32.mrb[0].mxu0
    %v416 = vadd.f32 %v320, %v415
    %v417 = vpop.f32.mrb[0].mxu0
    %418 = vdwg.mxu0
    %v419 = vmax.f32 %v401, 0.0
    %v420 = vmax.f32 %v406, 0.0
    %v421 = vmax.f32 %v411, 0.0
    %v422 = vmax.f32 %v416, 0.0
    %s423 = scalar_lea.vmem %s1, 96
    %v424 = vld [vmem:[%s423] sm:$0xff]
    %s425 = scalar_lea.vmem %s2, 96
    %v426 = vld [vmem:[%s425] sm:$0xff]
    %428 = vset.pattern.permute.xlu0 0
    %429 = vperm.xlu0 %428, %v426
    %v430 = vpop.permute.xlu0 %429
    %v433 = vsel %vm190, %v424, 0
    %435 = vmatprep.subr.mxu0 0.0
    %436 = vmatpush1.msra.mxu0 %v419
    %437 = vmatprep.subr.mxu0 0.0
    %438 = vmatpush1.msra.mxu0 %v420
    %439 = vmatprep.subr.mxu0 0.0
    %440 = vmatpush1.msra.mxu0 %v421
    %441 = vmatprep.subr.mxu0 0.0
    %442 = vmatpush1.msra.mxu0 %v422
    %443 = vmatprep.subr.mxu0 0.0
    %444 = vmatpush1.msra.mxu0 0.0
    %445 = vmatprep.subr.mxu0 0.0
    %446 = vmatpush1.msra.mxu0 0.0
    %447 = vmatprep.subr.mxu0 0.0
    %448 = vmatpush1.msra.mxu0 0.0
    %449 = vmatprep.subr.mxu0 0.0
    %450 = vmatpush1.msra.mxu0 0.0
    %451 = vmatprep.subr.mxu0 0.0
    %452 = vmatpush1.msra.mxu0 0.0
    %453 = vmatprep.subr.mxu0 0.0
    %454 = vmatpush1.msra.mxu0 0.0
    %455 = vmatprep.subr.mxu0 0.0
    %456 = vmatpush1.msra.mxu0 0.0
    %457 = vmatprep.subr.mxu0 0.0
    %458 = vmatpush1.msra.mxu0 0.0
    %459 = vmatprep.subr.mxu0 0.0
    %460 = vmatpush1.msra.mxu0 0.0
    %461 = vmatprep.subr.mxu0 0.0
    %462 = vmatpush1.msra.mxu0 0.0
    %463 = vmatprep.subr.mxu0 0.0
    %464 = vmatpush1.msra.mxu0 0.0
    %465 = vmatprep.subr.mxu0 0.0
    %466 = vmatpush1.msra.mxu0 0.0
    %467 = vmatprep.subr.mxu0 0.0
    %468 = vmatpush1.msra.mxu0 0.0
    %469 = vmatprep.subr.mxu0 0.0
    %470 = vmatpush1.msra.mxu0 0.0
    %471 = vmatprep.subr.mxu0 0.0
    %472 = vmatpush1.msra.mxu0 0.0
    %473 = vmatprep.subr.mxu0 0.0
    %474 = vmatpush1.msra.mxu0 0.0
    %475 = vmatprep.subr.mxu0 0.0
    %476 = vmatpush1.msra.mxu0 0.0
    %477 = vmatprep.subr.mxu0 0.0
    %478 = vmatpush1.msra.mxu0 0.0
    %479 = vmatprep.subr.mxu0 0.0
    %480 = vmatpush1.msra.mxu0 0.0
    %481 = vmatprep.subr.mxu0 0.0
    %482 = vmatpush1.msra.mxu0 0.0
    %483 = vmatprep.subr.mxu0 0.0
    %484 = vmatpush1.msra.mxu0 0.0
    %485 = vmatprep.subr.mxu0 0.0
    %486 = vmatpush1.msra.mxu0 0.0
    %487 = vmatprep.subr.mxu0 0.0
    %488 = vmatpush1.msra.mxu0 0.0
    %489 = vmatprep.subr.mxu0 0.0
    %490 = vmatpush1.msra.mxu0 0.0
    %491 = vmatprep.subr.mxu0 0.0
    %492 = vmatpush1.msra.mxu0 0.0
    %493 = vmatprep.subr.mxu0 0.0
    %494 = vmatpush1.msra.mxu0 0.0
    %495 = vmatprep.subr.mxu0 0.0
    %496 = vmatpush1.msra.mxu0 0.0
    %497 = vmatprep.subr.mxu0 0.0
    %498 = vmatpush1.msra.mxu0 0.0
    %499 = vmatprep.mubr.f32.mxu0 0.0
    %500 = vmatmul.mubr.f32.gmra.mrb[0].mxu0 %v433
    %v501 = vpop.f32.mrb[0].mxu0
    %v502 = vadd.f32 %v430, %v501
    %v503 = vpop.f32.mrb[0].mxu0
    %504 = vdwg.mxu0
    %vm505 = vcmask 64512
    %506 = vst.msk [vmem:[%s3] sm:$0xff] %vm505, %v502
    // Predicated region
    $region18: #{toy_model_forward.1} parent=1 // pred_check
      _
    $region19: #{toy_model_forward.1} parent=1 // pred_check_branch
      %508 = sbr.rel (0) target = $region21
    $region20: #{toy_model_forward.1} parent=1 // pred_region
      _
    $region21: #{toy_model_forward.1} parent=1 // pred_fallthru
      _
    // Predicated region
    $region22: #{toy_model_forward.1} parent=1 // pred_check
      _
    $region23: #{toy_model_forward.1} parent=1 // pred_check_branch
      %510 = sbr.rel (0) target = $region25
    $region24: #{toy_model_forward.1} parent=1 // pred_region
      _
    $region25: #{toy_model_forward.1} parent=1 // pred_fallthru
      _
    %511 = vsyncpa [#allocation3], 1

</llo_original>
